<compile_context>
chip_gen: v7x
topology: tpu7x:2x2x1
jax: 0.10.0
libtpu: 0.0.40
codegen_flags: <defaults>
</compile_context>

<pallas_src>
import jax
import jax.numpy as jnp
import numpy as np
from jax.experimental import pallas as pl
from jax.experimental.pallas import tpu as pltpu


# ----------------------------------------------------------------------------
# VMEM sizing helpers (generation-aware).
# ----------------------------------------------------------------------------
def _vmem_capacity_bytes():
    """Physical per-core VMEM; fall back to the v7x (smallest) figure."""
    try:
        return int(pltpu.get_tpu_info().vmem_capacity_bytes)
    except Exception:
        return 64 * 1024 * 1024


def _proj_vmem_bytes(N, C, C8):
    f32, bf16 = 4, 2
    blocks = (2 * N * C * f32                     # x block (double-buffered)
              + 2 * N * C * bf16                  # v output
              + 2 * C8 * N * bf16                 # k^T output
              + 2 * (C8 * C + C * C) * bf16       # weights
              + 2 * (C8 + C) * f32)               # biases
    interm = N * (C + C8) * f32 + N * C * bf16    # f32 accumulators + bf16 x
    return blocks + interm


def _attn_vmem_bytes(N, C, C8, TQ):
    f32, bf16 = 4, 2
    blocks = (2 * 2 * TQ * C * f32                # x row tile + output (x2 buf)
              + 2 * C8 * N * bf16                 # k^T resident (x2 buf)
              + 2 * N * C * bf16                  # v resident (x2 buf)
              + 2 * (C * C8 * bf16 + C8 * f32))   # Wq / bq
    interm = TQ * N * (f32 + bf16) + TQ * (C8 + 2 * C) * f32   # energy, p, q, pv
    return blocks + interm


def _choose_tq(N, C, C8, vmem_cap):
    """Largest row tile whose footprint fits ~75% of this chip's VMEM."""
    budget = int(0.75 * vmem_cap)
    for t in (512, 256, 128, 64, 32, 16, 8):
        if N % t == 0 and _attn_vmem_bytes(N, C, C8, t) <= budget:
            return t
    return N  # full-extent fallback (always layout-legal)


def _vmem_limit(est, cap):
    return int(max(min(0.9 * cap, 2 * est), 32 * 1024 * 1024))


# ----------------------------------------------------------------------------
# Kernel 1: key / value projections (once per batch element).
# ----------------------------------------------------------------------------
def pam_kv_kernel(x_ref, wkt_ref, bk_ref, wv_ref, bv_ref, kt_ref, v_ref):
    x = x_ref[0].astype(jnp.bfloat16)                               # (N, C)
    # kT[d, n] = sum_c Wk[c, d] * x[n, c]; Wk is shipped pre-transposed so we
    # contract the last dims of both operands (bf16 MXU, f32 accumulation).
    kt = jax.lax.dot_general(
        wkt_ref[...], x, dimension_numbers=(((1,), (1,)), ((), ())),
        preferred_element_type=jnp.float32) + bk_ref[...]           # (C8, N)
    v = jnp.dot(x, wv_ref[...],
                preferred_element_type=jnp.float32) + bv_ref[...]   # (N, C)
    kt_ref[0] = kt.astype(jnp.bfloat16)
    v_ref[0] = v.astype(jnp.bfloat16)


# ----------------------------------------------------------------------------
# Kernel 2: row-tiled attention.
# ----------------------------------------------------------------------------
def pam_attn_kernel(x_row_ref, kt_ref, v_ref, wq_ref, bq_ref, gamma_ref,
                    out_ref):
    x_row = x_row_ref[0]                                            # (TQ, C) f32
    # Query projection: bf16 MXU inputs, f32 accumulation.
    q = jnp.dot(x_row.astype(jnp.bfloat16), wq_ref[...],
                preferred_element_type=jnp.float32) + bq_ref[...]   # (TQ, C8)
    # energy[i, j] = <q_i, k_j>: plain matmul against the resident k^T block
    # (no per-tile transpose/relayout through the XLU).
    energy = jnp.dot(q.astype(jnp.bfloat16), kt_ref[0],
                     preferred_element_type=jnp.float32)            # (TQ, N)
    # Row softmax: max in f32, exp in bf16 (EUP bf16 path on v6e/v7x; result
    # is already bf16 for the PV matmul), row-sum in f32; normalization is
    # deferred until after the PV matmul.
    m = jnp.max(energy, axis=-1, keepdims=True)
    p = jnp.exp((energy - m).astype(jnp.bfloat16))                  # (TQ, N) bf16
    denom = jnp.sum(p.astype(jnp.float32), axis=-1, keepdims=True)  # (TQ, 1) f32
    pv = jnp.dot(p, v_ref[0], preferred_element_type=jnp.float32)   # (TQ, C) f32
    out = pv * pl.reciprocal(denom, approx=True)
    gamma = gamma_ref[0, 0]                                         # SMEM scalar
    out_ref[0] = gamma * out + x_row                                # f32 residual


# ----------------------------------------------------------------------------
# Wrapper.
# ----------------------------------------------------------------------------
def pam_forward(x_nchw, wq, bq, wk, bk, wv, bv, gamma, *, tq=None):
    """PAM forward.  x_nchw: (B, C, H, W) f32.  wq/wk: (C, C//8), wv: (C, C)
    stored (Cin, Cout); biases (1, Cout); gamma: (1, 1).  Returns NCHW f32."""
    B, C, H, W = x_nchw.shape
    N = H * W
    C8 = wq.shape[1]
    cap = _vmem_capacity_bytes()
    TQ = tq if tq is not None else _choose_tq(N, C, C8, cap)
    assert N % TQ == 0, "query-row tile must divide H*W"

    # Cast weights to bf16 once (MXU inputs); biases stay f32 and are added to
    # the f32 accumulator.  Wk is pre-transposed so k is produced directly in
    # (C//8, N) layout; its bias becomes a column vector.
    wq_b = wq.astype(jnp.bfloat16)
    wkt_b = wk.T.astype(jnp.bfloat16)            # (C8, C)
    bk_col = bk.reshape(C8, 1)                   # (C8, 1) f32
    wv_b = wv.astype(jnp.bfloat16)

    # NCHW -> (B, N, C); position n = h*W + w matches torch .view().
    # TODO(synk): keep the surrounding model channels-last to avoid these two
    # full-tensor HBM transposes outside the kernel.
    x_flat = jnp.transpose(x_nchw, (0, 2, 3, 1)).reshape(B, N, C)

    # --- Kernel 1: per-batch k^T / v projections (hoisted out of attention).
    # TODO(synk): for very large N (H*W >~ 16K at C=512) switch kernel 2 to a
    # key-tile loop with online softmax instead of resident k^T/v blocks, and
    # tile this projection over N as well.
    kt, v = pl.pallas_call(
        pam_kv_kernel,
        out_shape=(jax.ShapeDtypeStruct((B, C8, N), jnp.bfloat16),
                   jax.ShapeDtypeStruct((B, N, C), jnp.bfloat16)),
        grid_spec=pltpu.PrefetchScalarGridSpec(
            num_scalar_prefetch=0,
            grid=(B,),
            in_specs=[
                pl.BlockSpec((1, N, C), lambda b: (b, 0, 0)),    # x (full, f32)
                pl.BlockSpec((C8, C), lambda b: (0, 0)),         # Wk^T bf16
                pl.BlockSpec((C8, 1), lambda b: (0, 0)),         # bk (column) f32
                pl.BlockSpec((C, C), lambda b: (0, 0)),          # Wv bf16
                pl.BlockSpec((1, C), lambda b: (0, 0)),          # bv f32
            ],
            out_specs=[
                pl.BlockSpec((1, C8, N), lambda b: (b, 0, 0)),   # k^T bf16
                pl.BlockSpec((1, N, C), lambda b: (b, 0, 0)),    # v bf16
            ],
        ),
        compiler_params=pltpu.CompilerParams(
            dimension_semantics=("parallel",),
            vmem_limit_bytes=_vmem_limit(_proj_vmem_bytes(N, C, C8), cap),
        ),
    )(x_flat, wkt_b, bk_col, wv_b, bv)

    # --- Kernel 2: row-tiled attention.  k^T / v index maps are constant over
    # the row-tile axis (resident per batch element); there is no carried
    # state, so both grid axes are megacore-parallel (v7x: both TCs split row
    # tiles even at B == 1).
    out_flat = pl.pallas_call(
        pam_attn_kernel,
        out_shape=jax.ShapeDtypeStruct((B, N, C), jnp.float32),
        grid_spec=pltpu.PrefetchScalarGridSpec(
            num_scalar_prefetch=0,
            grid=(B, N // TQ),
            in_specs=[
                pl.BlockSpec((1, TQ, C), lambda b, i: (b, i, 0)),   # x rows f32
                pl.BlockSpec((1, C8, N), lambda b, i: (b, 0, 0)),   # k^T resident
                pl.BlockSpec((1, N, C), lambda b, i: (b, 0, 0)),    # v resident
                pl.BlockSpec((C, C8), lambda b, i: (0, 0)),         # Wq bf16
                pl.BlockSpec((1, C8), lambda b, i: (0, 0)),         # bq f32
                pl.BlockSpec(memory_space=pltpu.MemorySpace.SMEM),  # gamma scalar
            ],
            out_specs=pl.BlockSpec((1, TQ, C), lambda b, i: (b, i, 0)),
        ),
        compiler_params=pltpu.CompilerParams(
            dimension_semantics=("parallel", "parallel"),
            vmem_limit_bytes=_vmem_limit(_attn_vmem_bytes(N, C, C8, TQ), cap),
        ),
    )(x_flat, kt, v, wq_b, bq, gamma)

    return jnp.transpose(out_flat.reshape(B, H, W, C), (0, 3, 1, 2))


def pam_ref(x, wq, bq, wk, bk, wv, bv, gamma):
    """Pure-JAX reference mirroring the PyTorch forward (NCHW)."""
    B, C, H, W = x.shape
    N = H * W
    xf = x.reshape(B, C, N)
    q = jnp.einsum('cd,bcn->bdn', wq, xf) + bq.reshape(1, -1, 1)      # (B, C8, N)
    k = jnp.einsum('cd,bcn->bdn', wk, xf) + bk.reshape(1, -1, 1)      # (B, C8, N)
    v = jnp.einsum('cd,bcn->bdn', wv, xf) + bv.reshape(1, -1, 1)      # (B, C,  N)
    energy = jnp.einsum('bdn,bdm->bnm', q, k)                         # (B, N, N)
    attn = jax.nn.softmax(energy, axis=-1)
    out = jnp.einsum('bcm,bnm->bcn', v, attn).reshape(B, C, H, W)
    return gamma.reshape(()) * out + x


if __name__ == "__main__":
    B, C, H, W = 2, 16, 16, 16        # in_dim=16 -> query/key channels = 2; N = 256
    C8 = C // 8

    key = jax.random.PRNGKey(0)
    kx, kq, kbq, kk, kbk, kv, kbv = jax.random.split(key, 7)

    x = jax.random.normal(kx, (B, C, H, W), dtype=jnp.float32)

    # PyTorch conv weight (Cout, Cin, 1, 1) stored transposed as (Cin, Cout)
    # for the channels-last matmul formulation.
    wq = 0.1 * jax.random.normal(kq, (C, C8), dtype=jnp.float32)
    bq = 0.1 * jax.random.normal(kbq, (1, C8), dtype=jnp.float32)
    wk = 0.1 * jax.random.normal(kk, (C, C8), dtype=jnp.float32)
    bk = 0.1 * jax.random.normal(kbk, (1, C8), dtype=jnp.float32)
    wv = 0.1 * jax.random.normal(kv, (C, C), dtype=jnp.float32)
    bv = 0.1 * jax.random.normal(kbv, (1, C), dtype=jnp.float32)
    # nn.Parameter(torch.zeros(1)) initializes gamma = 0; use a nonzero value
    # so the attention path actually contributes to the checked output.
    gamma = jnp.full((1, 1), 0.5, dtype=jnp.float32)

    # tq=64 -> 4 query-row tiles per batch element: exercises the tiled path
    # and the resident (constant-index) k^T / v blocks.
    out = pam_forward(x, wq, bq, wk, bk, wv, bv, gamma, tq=64)
    out = jax.block_until_ready(out)

    ref = pam_ref(x, wq, bq, wk, bk, wv, bv, gamma)
    # bf16 MXU inputs, bf16 exp, and the approx EUP reciprocal -> slightly
    # looser tolerance than a pure-f32 implementation.
    np.testing.assert_allclose(np.asarray(out), np.asarray(ref),
                               rtol=2e-2, atol=2e-2)
    print("KERNEL_OK")
</pallas_src>

<mosaic_0001>
module attributes {stable_mosaic.version = 11 : i64} {
  func.func @pam_kv_kernel(%arg0: i32, %arg1: memref<1x256x16xf32, #tpu.memory_space<vmem>>, %arg2: memref<2x16xbf16, #tpu.memory_space<vmem>>, %arg3: memref<2x1xf32, #tpu.memory_space<vmem>>, %arg4: memref<16x16xbf16, #tpu.memory_space<vmem>>, %arg5: memref<1x16xf32, #tpu.memory_space<vmem>>, %arg6: memref<1x2x256xbf16, #tpu.memory_space<vmem>>, %arg7: memref<1x256x16xbf16, #tpu.memory_space<vmem>>) attributes {dimension_semantics = [#tpu.dimension_semantics<parallel>], iteration_bounds = array<i64: 2>, scalar_prefetch = 0 : i64, scratch_operands = 0 : i64, tpu.core_type = #tpu.core_type<tc>, window_params = [{transform_indices = @transform_0, window_bounds = array<i64: 1, 256, 16>}, {pipeline_mode = #tpu.pipeline_mode<synchronous>, transform_indices = @transform_1, window_bounds = array<i64: 2, 16>}, {pipeline_mode = #tpu.pipeline_mode<synchronous>, transform_indices = @transform_2, window_bounds = array<i64: 2, 1>}, {pipeline_mode = #tpu.pipeline_mode<synchronous>, transform_indices = @transform_3, window_bounds = array<i64: 16, 16>}, {pipeline_mode = #tpu.pipeline_mode<synchronous>, transform_indices = @transform_4, window_bounds = array<i64: 1, 16>}, {transform_indices = @transform_5, window_bounds = array<i64: 1, 2, 256>}, {transform_indices = @transform_6, window_bounds = array<i64: 1, 256, 16>}]} {
    %c0 = arith.constant 0 : index
    %c0_0 = arith.constant 0 : index
    %c0_1 = arith.constant 0 : index
    %0 = vector.load %arg1[%c0, %c0_0, %c0_1] : memref<1x256x16xf32, #tpu.memory_space<vmem>>, vector<1x256x16xf32>
    %1 = vector.shape_cast %0 : vector<1x256x16xf32> to vector<256x16xf32>
    %2 = arith.truncf %1 : vector<256x16xf32> to vector<256x16xbf16>
    %c0_2 = arith.constant 0 : index
    %c0_3 = arith.constant 0 : index
    %3 = vector.load %arg2[%c0_2, %c0_3] : memref<2x16xbf16, #tpu.memory_space<vmem>>, vector<2x16xbf16>
    %cst = arith.constant dense<0.000000e+00> : vector<2x256xf32>
    %4 = tpu.matmul %3, %2, %cst {dimension_numbers = #tpu.dot_dimension_numbers<[1], [1], [0], [0], [0, 0, 1, 0], [], []>} : vector<2x16xbf16>, vector<256x16xbf16>, vector<2x256xf32> -> vector<2x256xf32>
    %c0_4 = arith.constant 0 : index
    %c0_5 = arith.constant 0 : index
    %5 = vector.load %arg3[%c0_4, %c0_5] : memref<2x1xf32, #tpu.memory_space<vmem>>, vector<2x1xf32>
    %6 = vector.broadcast %5 : vector<2x1xf32> to vector<2x256xf32>
    %7 = arith.addf %4, %6 : vector<2x256xf32>
    %c0_6 = arith.constant 0 : index
    %c0_7 = arith.constant 0 : index
    %8 = vector.load %arg4[%c0_6, %c0_7] : memref<16x16xbf16, #tpu.memory_space<vmem>>, vector<16x16xbf16>
    %cst_8 = arith.constant dense<0.000000e+00> : vector<256x16xf32>
    %9 = tpu.matmul %2, %8, %cst_8 {dimension_numbers = #tpu.dot_dimension_numbers<[1], [0], [0], [1], [0, 0, 1, 1], [], []>} : vector<256x16xbf16>, vector<16x16xbf16>, vector<256x16xf32> -> vector<256x16xf32>
    %c0_9 = arith.constant 0 : index
    %c0_10 = arith.constant 0 : index
    %10 = vector.load %arg5[%c0_9, %c0_10] : memref<1x16xf32, #tpu.memory_space<vmem>>, vector<1x16xf32>
    %11 = vector.broadcast %10 : vector<1x16xf32> to vector<256x16xf32>
    %12 = arith.addf %9, %11 : vector<256x16xf32>
    %13 = arith.truncf %7 : vector<2x256xf32> to vector<2x256xbf16>
    %c0_11 = arith.constant 0 : index
    %c0_12 = arith.constant 0 : index
    %c0_13 = arith.constant 0 : index
    %14 = vector.load %arg6[%c0_11, %c0_12, %c0_13] : memref<1x2x256xbf16, #tpu.memory_space<vmem>>, vector<1x2x256xbf16>
    %15 = vector.shape_cast %14 : vector<1x2x256xbf16> to vector<2x256xbf16>
    %16 = vector.shape_cast %13 : vector<2x256xbf16> to vector<1x2x256xbf16>
    tpu.vector_store %arg6[%c0_11, %c0_12, %c0_13], %16 {strides = array<i32>} : memref<1x2x256xbf16, #tpu.memory_space<vmem>>, vector<1x2x256xbf16>,
    %17 = arith.truncf %12 : vector<256x16xf32> to vector<256x16xbf16>
    %c0_14 = arith.constant 0 : index
    %c0_15 = arith.constant 0 : index
    %c0_16 = arith.constant 0 : index
    %18 = vector.load %arg7[%c0_14, %c0_15, %c0_16] : memref<1x256x16xbf16, #tpu.memory_space<vmem>>, vector<1x256x16xbf16>
    %19 = vector.shape_cast %18 : vector<1x256x16xbf16> to vector<256x16xbf16>
    %20 = vector.shape_cast %17 : vector<256x16xbf16> to vector<1x256x16xbf16>
    tpu.vector_store %arg7[%c0_14, %c0_15, %c0_16], %20 {strides = array<i32>} : memref<1x256x16xbf16, #tpu.memory_space<vmem>>, vector<1x256x16xbf16>,
    return
  }
  func.func @transform_0(%arg0: i32) -> (i32, i32, i32) {
    %c0_i32 = arith.constant 0 : i32
    %c0_i32_0 = arith.constant 0 : i32
    %c0_i32_1 = arith.constant 0 : i32
    return %arg0, %c0_i32, %c0_i32_0 : i32, i32, i32
  }
  func.func @transform_1(%arg0: i32) -> (i32, i32) {
    %c0_i32 = arith.constant 0 : i32
    %c0_i32_0 = arith.constant 0 : i32
    %c0_i32_1 = arith.constant 0 : i32
    return %c0_i32, %c0_i32_0 : i32, i32
  }
  func.func @transform_2(%arg0: i32) -> (i32, i32) {
    %c0_i32 = arith.constant 0 : i32
    %c0_i32_0 = arith.constant 0 : i32
    %c0_i32_1 = arith.constant 0 : i32
    return %c0_i32, %c0_i32_0 : i32, i32
  }
  func.func @transform_3(%arg0: i32) -> (i32, i32) {
    %c0_i32 = arith.constant 0 : i32
    %c0_i32_0 = arith.constant 0 : i32
    %c0_i32_1 = arith.constant 0 : i32
    return %c0_i32, %c0_i32_0 : i32, i32
  }
  func.func @transform_4(%arg0: i32) -> (i32, i32) {
    %c0_i32 = arith.constant 0 : i32
    %c0_i32_0 = arith.constant 0 : i32
    %c0_i32_1 = arith.constant 0 : i32
    return %c0_i32, %c0_i32_0 : i32, i32
  }
  func.func @transform_5(%arg0: i32) -> (i32, i32, i32) {
    %c0_i32 = arith.constant 0 : i32
    %c0_i32_0 = arith.constant 0 : i32
    %c0_i32_1 = arith.constant 0 : i32
    return %arg0, %c0_i32, %c0_i32_0 : i32, i32, i32
  }
  func.func @transform_6(%arg0: i32) -> (i32, i32, i32) {
    %c0_i32 = arith.constant 0 : i32
    %c0_i32_0 = arith.constant 0 : i32
    %c0_i32_1 = arith.constant 0 : i32
    return %arg0, %c0_i32, %c0_i32_0 : i32, i32, i32
  }
}

</mosaic_0001>

<llo_original>
// kernel: tpu_custom_call.1
$region0: #{tpu_custom_call.1}
  #allocation0 [shape = 'u32[]', space=smem, size = 0x4, offset = 0x4, fixed_abs, tag = 'smem constant byte address 0x4 - core index']
  #allocation1 [shape = 'u32[144,128]{1,0:T(1,128)}', space=vmem, size = 0x12000, scoped, tag = 'internal scratch']
  %s0 = inlined_call_operand.vmem [shape: f32[2,256,16], index: 0, kind: input, shape index: {}]
  %s1 = inlined_call_operand.vmem [shape: bf16[2,16], index: 1, kind: input, shape index: {}]
  %s2 = inlined_call_operand.vmem [shape: f32[2,1], index: 2, kind: input, shape index: {}]
  %s3 = inlined_call_operand.vmem [shape: bf16[16,16], index: 3, kind: input, shape index: {}]
  %s4 = inlined_call_operand.vmem [shape: f32[1,16], index: 4, kind: input, shape index: {}]
  %s5 = inlined_call_operand.hbm [shape: bf16[2,2,256], index: 5, kind: output, shape index: {0}]
  %s6 = inlined_call_operand.vmem [shape: bf16[2,256,16], index: 6, kind: output, shape index: {1}]
  %7 = xla_tuple %s5, %s6
  %s8 = sld [smem:[#allocation0]]
  $region61: #{tpu_custom_call.1} parent=0
    _
  %s10 = ssub.s32 1, %s8
  %s11 = scalar_select 0, %s10, %s8
  $region1: #{tpu_custom_call.1} parent=0
    #allocation2 [shape = 'u8[2048]{0}', space=vmem, size = 0x800, scoped, tag = 'output window, operand 0']
    #allocation3 [shape = 's32[2]{0}', space=sflag, size = 0x8, scoped, tag = 'scoped memory for tpu_custom_call.1']
    %12 = vsyncpa [#allocation3], 0
    %s13 = scalar_lea.sflag [#allocation3], 1
    %14 = vsyncpa %s13, 0
    loop: start=0, step=1, limit=4
    $region2: #{tpu_custom_call.1} parent=1 // loop_pre_header
      _
    $region3: #{tpu_custom_call.1} parent=1 // loop_header
      %s16 = sphi 0, %s20
      %p17 = scmp.ge.s32.totalorder %s16, 4
      %s26 = sphi 0, %s28
      %s29 = sphi 0, %s26
      %s30 = sphi 0, %s29
      %s46 = sphi 0, %s30
      %s50 = sphi 0, %s50
      %s52 = sphi 0, %s50
      %s53 = sphi 0, %s52
      %s67 = sphi 0, %s53
      %s71 = sphi 0, %s71
      %s73 = sphi 0, %s71
      %s74 = sphi 0, %s73
      %s88 = sphi 0, %s74
      %s92 = sphi 0, %s92
      %s94 = sphi 0, %s92
      %s95 = sphi 0, %s94
      %s109 = sphi 0, %s95
      %s113 = sphi 0, %s113
      %s115 = sphi 0, %s113
      %s116 = sphi 0, %s115
      %s130 = sphi 0, %s116
      %s136 = sphi 0, %s138
      %s139 = sphi 0, %s136
      %s140 = sphi 0, %s139
      %s156 = sphi 0, %s140
      %s162 = sphi 0, %s164
      %s165 = sphi 0, %s162
      %s166 = sphi 0, %s165
      %s182 = sphi 0, %s166
    $region4: #{tpu_custom_call.1} parent=1 // loop_header_branch
      %19 = sbr.rel (%p17) target = $region8
    $region5: #{tpu_custom_call.1} parent=1 // loop_body
      %s21 = ssub.s32 %s16, 1
      %s22 = ssub.s32 %s16, 2
      %s23 = sadd.s32 %s16, 1
      %s24 = ssub.s32 %s16, %s23
      %p25 = scmp.eq.s32.totalorder %s24, 0
      %s27 = sadd.s32 %s26, 1
      %s28 = scalar_select %p25, %s26, %s27
      %p31 = pneg %p25
      %p32 = scmp.eq.s32.totalorder %s16, 1
      %p33 = por %p31, %p32
      %p34 = scmp.ne.s32.totalorder %s26, %s29
      %p35 = scmp.eq.s32.totalorder %s16, 0
      %p36 = por %p34, %p35
      %p37 = scmp.ne.s32.totalorder %s26, %s29
      %p38 = scmp.eq.s32.totalorder %s21, 1
      %p39 = por %p37, %p38
      %p40 = scmp.ne.s32.totalorder %s29, %s30
      %p41 = scmp.eq.s32.totalorder %s21, 0
      %p42 = por %p40, %p41
      %p43 = scmp.ne.s32.totalorder %s29, %s30
      %p44 = scmp.eq.s32.totalorder %s22, 1
      %p45 = por %p43, %p44
      %p47 = scmp.ne.s32.totalorder %s30, %s46
      %p48 = scmp.eq.s32.totalorder %s22, 0
      %p49 = por %p47, %p48
      %s51 = sadd.s32 %s50, 1
      %p54 = scmp.eq.s32.totalorder %s16, 1
      %p55 = scmp.ne.s32.totalorder %s50, %s52
      %p56 = scmp.eq.s32.totalorder %s16, 0
      %p57 = por %p55, %p56
      %p58 = scmp.ne.s32.totalorder %s50, %s52
      %p59 = scmp.eq.s32.totalorder %s21, 1
      %p60 = por %p58, %p59
      %p61 = scmp.ne.s32.totalorder %s52, %s53
      %p62 = scmp.eq.s32.totalorder %s21, 0
      %p63 = por %p61, %p62
      %p64 = scmp.ne.s32.totalorder %s52, %s53
      %p65 = scmp.eq.s32.totalorder %s22, 1
      %p66 = por %p64, %p65
      %p68 = scmp.ne.s32.totalorder %s53, %s67
      %p69 = scmp.eq.s32.totalorder %s22, 0
      %p70 = por %p68, %p69
      %s72 = sadd.s32 %s71, 1
      %p75 = scmp.eq.s32.totalorder %s16, 1
      %p76 = scmp.ne.s32.totalorder %s71, %s73
      %p77 = scmp.eq.s32.totalorder %s16, 0
      %p78 = por %p76, %p77
      %p79 = scmp.ne.s32.totalorder %s71, %s73
      %p80 = scmp.eq.s32.totalorder %s21, 1
      %p81 = por %p79, %p80
      %p82 = scmp.ne.s32.totalorder %s73, %s74
      %p83 = scmp.eq.s32.totalorder %s21, 0
      %p84 = por %p82, %p83
      %p85 = scmp.ne.s32.totalorder %s73, %s74
      %p86 = scmp.eq.s32.totalorder %s22, 1
      %p87 = por %p85, %p86
      %p89 = scmp.ne.s32.totalorder %s74, %s88
      %p90 = scmp.eq.s32.totalorder %s22, 0
      %p91 = por %p89, %p90
      %s93 = sadd.s32 %s92, 1
      %p96 = scmp.eq.s32.totalorder %s16, 1
      %p97 = scmp.ne.s32.totalorder %s92, %s94
      %p98 = scmp.eq.s32.totalorder %s16, 0
      %p99 = por %p97, %p98
      %p100 = scmp.ne.s32.totalorder %s92, %s94
      %p101 = scmp.eq.s32.totalorder %s21, 1
      %p102 = por %p100, %p101
      %p103 = scmp.ne.s32.totalorder %s94, %s95
      %p104 = scmp.eq.s32.totalorder %s21, 0
      %p105 = por %p103, %p104
      %p106 = scmp.ne.s32.totalorder %s94, %s95
      %p107 = scmp.eq.s32.totalorder %s22, 1
      %p108 = por %p106, %p107
      %p110 = scmp.ne.s32.totalorder %s95, %s109
      %p111 = scmp.eq.s32.totalorder %s22, 0
      %p112 = por %p110, %p111
      %s114 = sadd.s32 %s113, 1
      %p117 = scmp.eq.s32.totalorder %s16, 1
      %p118 = scmp.ne.s32.totalorder %s113, %s115
      %p119 = scmp.eq.s32.totalorder %s16, 0
      %p120 = por %p118, %p119
      %p121 = scmp.ne.s32.totalorder %s113, %s115
      %p122 = scmp.eq.s32.totalorder %s21, 1
      %p123 = por %p121, %p122
      %p124 = scmp.ne.s32.totalorder %s115, %s116
      %p125 = scmp.eq.s32.totalorder %s21, 0
      %p126 = por %p124, %p125
      %p127 = scmp.ne.s32.totalorder %s115, %s116
      %p128 = scmp.eq.s32.totalorder %s22, 1
      %p129 = por %p127, %p128
      %p131 = scmp.ne.s32.totalorder %s116, %s130
      %p132 = scmp.eq.s32.totalorder %s22, 0
      %p133 = por %p131, %p132
      %s134 = ssub.s32 %s16, %s23
      %p135 = scmp.eq.s32.totalorder %s134, 0
      %s137 = sadd.s32 %s136, 1
      %s138 = scalar_select %p135, %s136, %s137
      %p141 = pneg %p135
      %p142 = scmp.eq.s32.totalorder %s16, 1
      %p143 = por %p141, %p142
      %p144 = scmp.ne.s32.totalorder %s136, %s139
      %p145 = scmp.eq.s32.totalorder %s16, 0
      %p146 = por %p144, %p145
      %p147 = scmp.ne.s32.totalorder %s136, %s139
      %p148 = scmp.eq.s32.totalorder %s21, 1
      %p149 = por %p147, %p148
      %p150 = scmp.ne.s32.totalorder %s139, %s140
      %p151 = scmp.eq.s32.totalorder %s21, 0
      %p152 = por %p150, %p151
      %p153 = scmp.ne.s32.totalorder %s139, %s140
      %p154 = scmp.eq.s32.totalorder %s22, 1
      %p155 = por %p153, %p154
      %p157 = scmp.ne.s32.totalorder %s140, %s156
      %p158 = scmp.eq.s32.totalorder %s22, 0
      %p159 = por %p157, %p158
      %s160 = ssub.s32 %s16, %s23
      %p161 = scmp.eq.s32.totalorder %s160, 0
      %s163 = sadd.s32 %s162, 1
      %s164 = scalar_select %p161, %s162, %s163
      %p167 = pneg %p161
      %p168 = scmp.eq.s32.totalorder %s16, 1
      %p169 = por %p167, %p168
      %p170 = scmp.ne.s32.totalorder %s162, %s165
      %p171 = scmp.eq.s32.totalorder %s16, 0
      %p172 = por %p170, %p171
      %p173 = scmp.ne.s32.totalorder %s162, %s165
      %p174 = scmp.eq.s32.totalorder %s21, 1
      %p175 = por %p173, %p174
      %p176 = scmp.ne.s32.totalorder %s165, %s166
      %p177 = scmp.eq.s32.totalorder %s21, 0
      %p178 = por %p176, %p177
      %p179 = scmp.ne.s32.totalorder %s165, %s166
      %p180 = scmp.eq.s32.totalorder %s22, 1
      %p181 = por %p179, %p180
      %p183 = scmp.ne.s32.totalorder %s166, %s182
      %p184 = scmp.eq.s32.totalorder %s22, 0
      %p185 = por %p183, %p184
      %p186 = scmp.le.s32.totalorder 1, %s16
      %p187 = scmp.lt.s32.totalorder %s16, 3
      %p188 = pnand %p186, %p187
      %p189 = pneg %p188
      // Predicated region
      $region9: #{tpu_custom_call.1} parent=5 // pred_check
        _
      $region10: #{tpu_custom_call.1} parent=5 // pred_check_branch
        %191 = sbr.rel (%p188) target = $region12
      $region11: #{tpu_custom_call.1} parent=5 // pred_region
        %s192 = ssub.s32 %s16, 1
        // Predicated region
        $region13: #{tpu_custom_call.1} parent=11 // pred_check
          %p193 = pneg %p63
        $region14: #{tpu_custom_call.1} parent=11 // pred_check_branch
          %195 = sbr.rel (%p193) target = $region16
        $region15: #{tpu_custom_call.1} parent=11 // pred_region
          _
        $region16: #{tpu_custom_call.1} parent=11 // pred_fallthru
          _
        // Predicated region
        $region17: #{tpu_custom_call.1} parent=11 // pred_check
          %p196 = pneg %p84
        $region18: #{tpu_custom_call.1} parent=11 // pred_check_branch
          %198 = sbr.rel (%p196) target = $region20
        $region19: #{tpu_custom_call.1} parent=11 // pred_region
          _
        $region20: #{tpu_custom_call.1} parent=11 // pred_fallthru
          _
        // Predicated region
        $region21: #{tpu_custom_call.1} parent=11 // pred_check
          %p199 = pneg %p105
        $region22: #{tpu_custom_call.1} parent=11 // pred_check_branch
          %201 = sbr.rel (%p199) target = $region24
        $region23: #{tpu_custom_call.1} parent=11 // pred_region
          _
        $region24: #{tpu_custom_call.1} parent=11 // pred_fallthru
          _
        // Predicated region
        $region25: #{tpu_custom_call.1} parent=11 // pred_check
          %p202 = pneg %p126
        $region26: #{tpu_custom_call.1} parent=11 // pred_check_branch
          %204 = sbr.rel (%p202) target = $region28
        $region27: #{tpu_custom_call.1} parent=11 // pred_region
          _
        $region28: #{tpu_custom_call.1} parent=11 // pred_fallthru
          _
      $region12: #{tpu_custom_call.1} parent=5 // pred_fallthru
        _
      %p205 = scmp.lt.s32.totalorder %s16, 2
      // Predicated region
      $region29: #{tpu_custom_call.1} parent=5 // pred_check
        %p206 = pneg %p205
      $region30: #{tpu_custom_call.1} parent=5 // pred_check_branch
        %208 = sbr.rel (%p206) target = $region32
      $region31: #{tpu_custom_call.1} parent=5 // pred_region
        // Predicated region
        $region33: #{tpu_custom_call.1} parent=31 // pred_check
          %p209 = pneg %p36
        $region34: #{tpu_custom_call.1} parent=31 // pred_check_branch
          %211 = sbr.rel (%p209) target = $region36
        $region35: #{tpu_custom_call.1} parent=31 // pred_region
          %p212 = scmp.lt.s32.totalorder %s16, 1
          %s213 = scalar_select %p212, %s16, 1
          %s214 = smul.addr %s213, 32
          %s215 = smul.addr %s214, 8
          %s216 = scalar_lea.vmem %s0, %s215
        $region36: #{tpu_custom_call.1} parent=31 // pred_fallthru
          _
      $region32: #{tpu_custom_call.1} parent=5 // pred_fallthru
        _
      %p217 = scmp.le.s32.totalorder 1, %s16
      %p218 = scmp.lt.s32.totalorder %s16, 3
      %p219 = pnand %p217, %p218
      %p220 = pneg %p219
      // Predicated region
      $region37: #{tpu_custom_call.1} parent=5 // pred_check
        _
      $region38: #{tpu_custom_call.1} parent=5 // pred_check_branch
        %222 = sbr.rel (%p219) target = $region40
      $region39: #{tpu_custom_call.1} parent=5 // pred_region
        %s223 = ssub.s32 %s16, 1
        %p224 = scmp.lt.s32.totalorder %s21, 1
        %s225 = scalar_select %p224, %s21, 1
        %s226 = smul.addr %s225, 32
        %s227 = smul.addr %s226, 8
        %s228 = scalar_lea.vmem %s0, %s227
        %p229 = pneg %p42
        %p230 = pneg %p39
        %p231 = pneg %p63
        %p232 = pneg %p60
        %p233 = pneg %p84
        %p234 = pneg %p81
        %p235 = pneg %p105
        %p236 = pneg %p102
        %p237 = pneg %p126
        %p238 = pneg %p123
        %p239 = pneg %p152
        %p240 = pneg %p149
        %s241 = sand.u32 %s139, 1
        %s242 = scalar_lea.sflag [#allocation3], %s241
        %s243 = sand.u32 %s139, 1
        %s244 = smul.addr %s243, 2
        %s245 = scalar_lea.vmem [#allocation2], %s244
        %p246 = pneg %p178
        %p247 = pneg %p175
        %p248 = scmp.lt.s32.totalorder %s21, 1
        %s249 = scalar_select %p248, %s21, 1
        %s250 = smul.addr %s249, 32
        %s251 = smul.addr %s250, 4
        %s252 = scalar_lea.vmem %s6, %s251
        %p253 = scmp.lt.s32.totalorder %s21, 1
        %s254 = scalar_select %p253, %s21, 1
        %s255 = smul.addr %s254, 32
        %s256 = smul.addr %s255, 8
        %s257 = scalar_lea.vmem %s0, %s256
        %p258 = scmp.lt.s32.totalorder %s21, 1
        %s259 = scalar_select %p258, %s21, 1
        %s260 = smul.addr %s259, 32
        %s261 = smul.addr %s260, 4
        %s262 = scalar_lea.vmem %s6, %s261
        %v264 = vld [vmem:[%s257] sm:$0xff]
        %v265 = vld [vmem:[%s257 + $0x8] sm:$0xff]
        %v266 = vld [vmem:[%s257 + $0x10] sm:$0xff]
        %v267 = vld [vmem:[%s257 + $0x18] sm:$0xff]
        %v268 = vld [vmem:[%s257 + $0x20] sm:$0xff]
        %v269 = vld [vmem:[%s257 + $0x28] sm:$0xff]
        %v270 = vld [vmem:[%s257 + $0x30] sm:$0xff]
        %v271 = vld [vmem:[%s257 + $0x38] sm:$0xff]
        %v272 = vld [vmem:[%s257 + $0x40] sm:$0xff]
        %v273 = vld [vmem:[%s257 + $0x48] sm:$0xff]
        %v274 = vld [vmem:[%s257 + $0x50] sm:$0xff]
        %v275 = vld [vmem:[%s257 + $0x58] sm:$0xff]
        %v276 = vld [vmem:[%s257 + $0x60] sm:$0xff]
        %v277 = vld [vmem:[%s257 + $0x68] sm:$0xff]
        %v278 = vld [vmem:[%s257 + $0x70] sm:$0xff]
        %v279 = vld [vmem:[%s257 + $0x78] sm:$0xff]
        %v280 = vld [vmem:[%s257 + $0x80] sm:$0xff]
        %v281 = vld [vmem:[%s257 + $0x88] sm:$0xff]
        %v282 = vld [vmem:[%s257 + $0x90] sm:$0xff]
        %v283 = vld [vmem:[%s257 + $0x98] sm:$0xff]
        %v284 = vld [vmem:[%s257 + $0xa0] sm:$0xff]
        %v285 = vld [vmem:[%s257 + $0xa8] sm:$0xff]
        %v286 = vld [vmem:[%s257 + $0xb0] sm:$0xff]
        %v287 = vld [vmem:[%s257 + $0xb8] sm:$0xff]
        %v288 = vld [vmem:[%s257 + $0xc0] sm:$0xff]
        %v289 = vld [vmem:[%s257 + $0xc8] sm:$0xff]
        %v290 = vld [vmem:[%s257 + $0xd0] sm:$0xff]
        %v291 = vld [vmem:[%s257 + $0xd8] sm:$0xff]
        %v292 = vld [vmem:[%s257 + $0xe0] sm:$0xff]
        %v293 = vld [vmem:[%s257 + $0xe8] sm:$0xff]
        %v294 = vld [vmem:[%s257 + $0xf0] sm:$0xff]
        %v295 = vld [vmem:[%s257 + $0xf8] sm:$0xff]
        %v296 = vpack.c.bf16 %v265, %v264
        %v297 = vpack.c.bf16 %v267, %v266
        %v298 = vpack.c.bf16 %v269, %v268
        %v299 = vpack.c.bf16 %v271, %v270
        %v300 = vpack.c.bf16 %v273, %v272
        %v301 = vpack.c.bf16 %v275, %v274
        %v302 = vpack.c.bf16 %v277, %v276
        %v303 = vpack.c.bf16 %v279, %v278
        %v304 = vpack.c.bf16 %v281, %v280
        %v305 = vpack.c.bf16 %v283, %v282
        %v306 = vpack.c.bf16 %v285, %v284
        %v307 = vpack.c.bf16 %v287, %v286
        %v308 = vpack.c.bf16 %v289, %v288
        %v309 = vpack.c.bf16 %v291, %v290
        %v310 = vpack.c.bf16 %v293, %v292
        %v311 = vpack.c.bf16 %v295, %v294
        %v312 = vld [vmem:[%s1] sm:$0x1]
        %v313 = vld [vmem:[%s2] sm:$0x3]
        %315 = vset.pattern.permute.xlu0 0
        %316 = vperm.xlu0 %315, %v313
        %v317 = vpop.permute.xlu0 %316
        %vm319 = vcmask 130048
        %v321 = vsel %vm319, %v312, 0
        %v324 = vsel %vm319, %v296, 0
        %v327 = vsel %vm319, %v297, 0
        %v330 = vsel %vm319, %v298, 0
        %v333 = vsel %vm319, %v299, 0
        %v336 = vsel %vm319, %v300, 0
        %v339 = vsel %vm319, %v301, 0
        %v342 = vsel %vm319, %v302, 0
        %v345 = vsel %vm319, %v303, 0
        %v348 = vsel %vm319, %v304, 0
        %v351 = vsel %vm319, %v305, 0
        %v354 = vsel %vm319, %v306, 0
        %v357 = vsel %vm319, %v307, 0
        %v360 = vsel %vm319, %v308, 0
        %v363 = vsel %vm319, %v309, 0
        %v366 = vsel %vm319, %v310, 0
        %v369 = vsel %vm319, %v311, 0
        %371 = vmatprep.subr.bf16.mxu0 0
        %372 = vmatpush1.bf16.xpose.msra.mxu0 %v324
        %373 = vmatprep.subr.bf16.mxu0 0
        %374 = vmatpush1.bf16.xpose.msra.mxu0 %v327
        %375 = vmatprep.subr.bf16.mxu0 0
        %376 = vmatpush1.bf16.xpose.msra.mxu0 %v330
        %377 = vmatprep.subr.bf16.mxu0 0
        %378 = vmatpush1.bf16.xpose.msra.mxu0 %v333
        %379 = vmatprep.subr.bf16.mxu0 0
        %380 = vmatpush1.bf16.xpose.msra.mxu0 %v336
        %381 = vmatprep.subr.bf16.mxu0 0
        %382 = vmatpush1.bf16.xpose.msra.mxu0 %v339
        %383 = vmatprep.subr.bf16.mxu0 0
        %384 = vmatpush1.bf16.xpose.msra.mxu0 %v342
        %385 = vmatprep.subr.bf16.mxu0 0
        %386 = vmatpush1.bf16.xpose.msra.mxu0 %v345
        %387 = vmatprep.subr.bf16.mxu0 0
        %388 = vmatpush1.bf16.xpose.msra.mxu0 %v348
        %389 = vmatprep.subr.bf16.mxu0 0
        %390 = vmatpush1.bf16.xpose.msra.mxu0 %v351
        %391 = vmatprep.subr.bf16.mxu0 0
        %392 = vmatpush1.bf16.xpose.msra.mxu0 %v354
        %393 = vmatprep.subr.bf16.mxu0 0
        %394 = vmatpush1.bf16.xpose.msra.mxu0 %v357
        %395 = vmatprep.subr.bf16.mxu0 0
        %396 = vmatpush1.bf16.xpose.msra.mxu0 %v360
        %397 = vmatprep.subr.bf16.mxu0 0
        %398 = vmatpush1.bf16.xpose.msra.mxu0 %v363
        %399 = vmatprep.subr.bf16.mxu0 0
        %400 = vmatpush1.bf16.xpose.msra.mxu0 %v366
        %401 = vmatprep.subr.bf16.mxu0 0
        %402 = vmatpush1.bf16.xpose.msra.mxu0 %v369
        %403 = vmatprep.mubr.bf16.mxu0 0
        %404 = vmatmul.mubr.bf16.gmra.mrb[0].mxu0 %v321
        %v405 = vpop.f32.mrb[0].mxu0
        %v406 = vadd.f32 %v317, %v405
        %v407 = vpop.f32.mrb[0].mxu0
        %v408 = vadd.f32 %v317, %v407
        %v409 = vpop.f32.mrb[0].mxu0
        %v410 = vpop.f32.mrb[0].mxu0
        %411 = vdwg.mxu0
        %v412 = vld [vmem:[%s3] sm:$0xf]
        %v413 = vld [vmem:[%s3 + $0x4] sm:$0xf]
        %v414 = vld [vmem:[%s4] sm:$0x1]
        %v416 = vlaneseq
        %v417 = vshrl.u32 %v416, 7
        %v418 = vsub.s32 0, %v417
        %v419 = vrot.slane %v414, %v418
        %v423 = vunpack.c.l.b16 %v412
        %v424 = vunpack.c.l.b16 %v413
        %v425 = vpack.c.b16 %v424, %v423
        %427 = vmatprep.subr.bf16.mxu0 0
        %428 = vmatpush1.bf16.msra.mxu0 %v425
        %429 = vmatprep.subr.bf16.mxu0 0
        %430 = vmatpush1.bf16.msra.mxu0 0
        %431 = vmatprep.subr.bf16.mxu0 0
        %432 = vmatpush1.bf16.msra.mxu0 0
        %433 = vmatprep.subr.bf16.mxu0 0
        %434 = vmatpush1.bf16.msra.mxu0 0
        %435 = vmatprep.subr.bf16.mxu0 0
        %436 = vmatpush1.bf16.msra.mxu0 0
        %437 = vmatprep.subr.bf16.mxu0 0
        %438 = vmatpush1.bf16.msra.mxu0 0
        %439 = vmatprep.subr.bf16.mxu0 0
        %440 = vmatpush1.bf16.msra.mxu0 0
        %441 = vmatprep.subr.bf16.mxu0 0
        %442 = vmatpush1.bf16.msra.mxu0 0
        %443 = vmatprep.subr.bf16.mxu0 0
        %444 = vmatpush1.bf16.msra.mxu0 0
        %445 = vmatprep.subr.bf16.mxu0 0
        %446 = vmatpush1.bf16.msra.mxu0 0
        %447 = vmatprep.subr.bf16.mxu0 0
        %448 = vmatpush1.bf16.msra.mxu0 0
        %449 = vmatprep.subr.bf16.mxu0 0
        %450 = vmatpush1.bf16.msra.mxu0 0
        %451 = vmatprep.subr.bf16.mxu0 0
        %452 = vmatpush1.bf16.msra.mxu0 0
        %453 = vmatprep.subr.bf16.mxu0 0
        %454 = vmatpush1.bf16.msra.mxu0 0
        %455 = vmatprep.subr.bf16.mxu0 0
        %456 = vmatpush1.bf16.msra.mxu0 0
        %457 = vmatprep.subr.bf16.mxu0 0
        %458 = vmatpush1.bf16.msra.mxu0 0
        %459 = vmatprep.mubr.bf16.mxu0 0
        %460 = vmatmul.mubr.bf16.gmra.mrb[0].mxu0 %v324
        %v461 = vpop.f32.mrb[0].mxu0
        %v462 = vadd.f32 %v419, %v461
        %v463 = vpop.f32.mrb[0].mxu0
        %v464 = vpop.f32.mrb[0].mxu0
        %v465 = vadd.f32 %v419, %v464
        %v466 = vpop.f32.mrb[0].mxu0
        %467 = vmatprep.mubr.bf16.mxu0 0
        %468 = vmatmul.mubr.bf16.gmra.mrb[0].mxu0 %v327
        %v469 = vpop.f32.mrb[0].mxu0
        %v470 = vadd.f32 %v419, %v469
        %v471 = vpop.f32.mrb[0].mxu0
        %v472 = vpop.f32.mrb[0].mxu0
        %v473 = vadd.f32 %v419, %v472
        %v474 = vpop.f32.mrb[0].mxu0
        %475 = vmatprep.mubr.bf16.mxu0 0
        %476 = vmatmul.mubr.bf16.gmra.mrb[0].mxu0 %v330
        %v477 = vpop.f32.mrb[0].mxu0
        %v478 = vadd.f32 %v419, %v477
        %v479 = vpop.f32.mrb[0].mxu0
        %v480 = vpop.f32.mrb[0].mxu0
        %v481 = vadd.f32 %v419, %v480
        %v482 = vpop.f32.mrb[0].mxu0
        %483 = vmatprep.mubr.bf16.mxu0 0
        %484 = vmatmul.mubr.bf16.gmra.mrb[0].mxu0 %v333
        %v485 = vpop.f32.mrb[0].mxu0
        %v486 = vadd.f32 %v419, %v485
        %v487 = vpop.f32.mrb[0].mxu0
        %v488 = vpop.f32.mrb[0].mxu0
        %v489 = vadd.f32 %v419, %v488
        %v490 = vpop.f32.mrb[0].mxu0
        %491 = vmatprep.mubr.bf16.mxu0 0
        %492 = vmatmul.mubr.bf16.gmra.mrb[0].mxu0 %v336
        %v493 = vpop.f32.mrb[0].mxu0
        %v494 = vadd.f32 %v419, %v493
        %v495 = vpop.f32.mrb[0].mxu0
        %v496 = vpop.f32.mrb[0].mxu0
        %v497 = vadd.f32 %v419, %v496
        %v498 = vpop.f32.mrb[0].mxu0
        %499 = vmatprep.mubr.bf16.mxu0 0
        %500 = vmatmul.mubr.bf16.gmra.mrb[0].mxu0 %v339
        %v501 = vpop.f32.mrb[0].mxu0
        %v502 = vadd.f32 %v419, %v501
        %v503 = vpop.f32.mrb[0].mxu0
        %v504 = vpop.f32.mrb[0].mxu0
        %v505 = vadd.f32 %v419, %v504
        %v506 = vpop.f32.mrb[0].mxu0
        %507 = vmatprep.mubr.bf16.mxu0 0
        %508 = vmatmul.mubr.bf16.gmra.mrb[0].mxu0 %v342
        %v509 = vpop.f32.mrb[0].mxu0
        %v510 = vadd.f32 %v419, %v509
        %v511 = vpop.f32.mrb[0].mxu0
        %v512 = vpop.f32.mrb[0].mxu0
        %v513 = vadd.f32 %v419, %v512
        %v514 = vpop.f32.mrb[0].mxu0
        %515 = vmatprep.mubr.bf16.mxu0 0
        %516 = vmatmul.mubr.bf16.gmra.mrb[0].mxu0 %v345
        %v517 = vpop.f32.mrb[0].mxu0
        %v518 = vadd.f32 %v419, %v517
        %v519 = vpop.f32.mrb[0].mxu0
        %v520 = vpop.f32.mrb[0].mxu0
        %v521 = vadd.f32 %v419, %v520
        %v522 = vpop.f32.mrb[0].mxu0
        %523 = vmatprep.mubr.bf16.mxu0 0
        %524 = vmatmul.mubr.bf16.gmra.mrb[0].mxu0 %v348
        %v525 = vpop.f32.mrb[0].mxu0
        %v526 = vadd.f32 %v419, %v525
        %v527 = vpop.f32.mrb[0].mxu0
        %v528 = vpop.f32.mrb[0].mxu0
        %v529 = vadd.f32 %v419, %v528
        %v530 = vpop.f32.mrb[0].mxu0
        %531 = vmatprep.mubr.bf16.mxu0 0
        %532 = vmatmul.mubr.bf16.gmra.mrb[0].mxu0 %v351
        %v533 = vpop.f32.mrb[0].mxu0
        %v534 = vadd.f32 %v419, %v533
        %v535 = vpop.f32.mrb[0].mxu0
        %v536 = vpop.f32.mrb[0].mxu0
        %v537 = vadd.f32 %v419, %v536
        %v538 = vpop.f32.mrb[0].mxu0
        %539 = vmatprep.mubr.bf16.mxu0 0
        %540 = vmatmul.mubr.bf16.gmra.mrb[0].mxu0 %v354
        %v541 = vpop.f32.mrb[0].mxu0
        %v542 = vadd.f32 %v419, %v541
        %v543 = vpop.f32.mrb[0].mxu0
        %v544 = vpop.f32.mrb[0].mxu0
        %v545 = vadd.f32 %v419, %v544
        %v546 = vpop.f32.mrb[0].mxu0
        %547 = vmatprep.mubr.bf16.mxu0 0
        %548 = vmatmul.mubr.bf16.gmra.mrb[0].mxu0 %v357
        %v549 = vpop.f32.mrb[0].mxu0
        %v550 = vadd.f32 %v419, %v549
        %v551 = vpop.f32.mrb[0].mxu0
        %v552 = vpop.f32.mrb[0].mxu0
        %v553 = vadd.f32 %v419, %v552
        %v554 = vpop.f32.mrb[0].mxu0
        %555 = vmatprep.mubr.bf16.mxu0 0
        %556 = vmatmul.mubr.bf16.gmra.mrb[0].mxu0 %v360
        %v557 = vpop.f32.mrb[0].mxu0
        %v558 = vadd.f32 %v419, %v557
        %v559 = vpop.f32.mrb[0].mxu0
        %v560 = vpop.f32.mrb[0].mxu0
        %v561 = vadd.f32 %v419, %v560
        %v562 = vpop.f32.mrb[0].mxu0
        %563 = vmatprep.mubr.bf16.mxu0 0
        %564 = vmatmul.mubr.bf16.gmra.mrb[0].mxu0 %v363
        %v565 = vpop.f32.mrb[0].mxu0
        %v566 = vadd.f32 %v419, %v565
        %v567 = vpop.f32.mrb[0].mxu0
        %v568 = vpop.f32.mrb[0].mxu0
        %v569 = vadd.f32 %v419, %v568
        %v570 = vpop.f32.mrb[0].mxu0
        %571 = vmatprep.mubr.bf16.mxu0 0
        %572 = vmatmul.mubr.bf16.gmra.mrb[0].mxu0 %v366
        %v573 = vpop.f32.mrb[0].mxu0
        %v574 = vadd.f32 %v419, %v573
        %v575 = vpop.f32.mrb[0].mxu0
        %v576 = vpop.f32.mrb[0].mxu0
        %v577 = vadd.f32 %v419, %v576
        %v578 = vpop.f32.mrb[0].mxu0
        %579 = vmatprep.mubr.bf16.mxu0 0
        %580 = vmatmul.mubr.bf16.gmra.mrb[0].mxu0 %v369
        %v581 = vpop.f32.mrb[0].mxu0
        %v582 = vadd.f32 %v419, %v581
        %v583 = vpop.f32.mrb[0].mxu0
        %v584 = vpop.f32.mrb[0].mxu0
        %v585 = vadd.f32 %v419, %v584
        %v586 = vpop.f32.mrb[0].mxu0
        %587 = vdwg.mxu0
        %v588 = vpack.c.bf16 %v406, %v406
        %v589 = vpack.c.bf16 %v408, %v408
        %v592 = vcombine.low %v588, %v589
        %v594 = vunpack.c.l.s4 1966171168
        %v595 = vunpack.c.0.s8 %v594
        %v596 = vlaneseq
        %v597 = vshrl.u32 %v596, 7
        %v598 = vsub.s32 %v595, %v597
        %v599 = vrot.slane %v592, %v598
        %v601 = vunpack.c.l.s4 1966171168
        %v602 = vunpack.c.0.s8 %v601
        %v603 = vlaneseq
        %v604 = vshrl.u32 %v603, 7
        %v605 = vsub.s32 %v602, %v604
        %v606 = vrot.slane %v599, %v605
        %608 = vst [vmem:[%s245] sm:$0x3] %v606
        %v609 = vpack.c.bf16 %v465, %v462
        %v610 = vpack.c.bf16 %v473, %v470
        %v611 = vpack.c.bf16 %v481, %v478
        %v612 = vpack.c.bf16 %v489, %v486
        %v613 = vpack.c.bf16 %v497, %v494
        %v614 = vpack.c.bf16 %v505, %v502
        %v615 = vpack.c.bf16 %v513, %v510
        %v616 = vpack.c.bf16 %v521, %v518
        %v617 = vpack.c.bf16 %v529, %v526
        %v618 = vpack.c.bf16 %v537, %v534
        %v619 = vpack.c.bf16 %v545, %v542
        %v620 = vpack.c.bf16 %v553, %v550
        %v621 = vpack.c.bf16 %v561, %v558
        %v622 = vpack.c.bf16 %v569, %v566
        %v623 = vpack.c.bf16 %v577, %v574
        %v624 = vpack.c.bf16 %v585, %v582
        %v641 = vunpack.c.l.b16 %v609
        %v642 = vunpack.c.h.b16 %v609
        %v643 = vunpack.c.l.b16 %v610
        %v644 = vunpack.c.h.b16 %v610
        %v645 = vunpack.c.l.b16 %v611
        %v646 = vunpack.c.h.b16 %v611
        %v647 = vunpack.c.l.b16 %v612
        %v648 = vunpack.c.h.b16 %v612
        %v649 = vunpack.c.l.b16 %v613
        %v650 = vunpack.c.h.b16 %v613
        %v651 = vunpack.c.l.b16 %v614
        %v652 = vunpack.c.h.b16 %v614
        %v653 = vunpack.c.l.b16 %v615
        %v654 = vunpack.c.h.b16 %v615
        %v655 = vunpack.c.l.b16 %v616
        %v656 = vunpack.c.h.b16 %v616
        %v657 = vunpack.c.l.b16 %v617
        %v658 = vunpack.c.h.b16 %v617
        %v659 = vunpack.c.l.b16 %v618
        %v660 = vunpack.c.h.b16 %v618
        %v661 = vunpack.c.l.b16 %v619
        %v662 = vunpack.c.h.b16 %v619
        %v663 = vunpack.c.l.b16 %v620
        %v664 = vunpack.c.h.b16 %v620
        %v665 = vunpack.c.l.b16 %v621
        %v666 = vunpack.c.h.b16 %v621
        %v667 = vunpack.c.l.b16 %v622
        %v668 = vunpack.c.h.b16 %v622
        %v669 = vunpack.c.l.b16 %v623
        %v670 = vunpack.c.h.b16 %v623
        %v671 = vunpack.c.l.b16 %v624
        %v672 = vunpack.c.h.b16 %v624
        %v673 = vpack.c.b16 %v641, %v641
        %v674 = vpack.c.b16 %v642, %v642
        %v675 = vpack.c.b16 %v643, %v643
        %v676 = vpack.c.b16 %v644, %v644
        %v677 = vpack.c.b16 %v645, %v645
        %v678 = vpack.c.b16 %v646, %v646
        %v679 = vpack.c.b16 %v647, %v647
        %v680 = vpack.c.b16 %v648, %v648
        %v681 = vpack.c.b16 %v649, %v649
        %v682 = vpack.c.b16 %v650, %v650
        %v683 = vpack.c.b16 %v651, %v651
        %v684 = vpack.c.b16 %v652, %v652
        %v685 = vpack.c.b16 %v653, %v653
        %v686 = vpack.c.b16 %v654, %v654
        %v687 = vpack.c.b16 %v655, %v655
        %v688 = vpack.c.b16 %v656, %v656
        %v689 = vpack.c.b16 %v657, %v657
        %v690 = vpack.c.b16 %v658, %v658
        %v691 = vpack.c.b16 %v659, %v659
        %v692 = vpack.c.b16 %v660, %v660
        %v693 = vpack.c.b16 %v661, %v661
        %v694 = vpack.c.b16 %v662, %v662
        %v695 = vpack.c.b16 %v663, %v663
        %v696 = vpack.c.b16 %v664, %v664
        %v697 = vpack.c.b16 %v665, %v665
        %v698 = vpack.c.b16 %v666, %v666
        %v699 = vpack.c.b16 %v667, %v667
        %v700 = vpack.c.b16 %v668, %v668
        %v701 = vpack.c.b16 %v669, %v669
        %v702 = vpack.c.b16 %v670, %v670
        %v703 = vpack.c.b16 %v671, %v671
        %v704 = vpack.c.b16 %v672, %v672
        %vm737 = vcmask 125952
        %738 = vst.msk [vmem:[%s262] sm:$0xf] %vm737, %v673
        %739 = vst.msk [vmem:[%s262 + $0x4] sm:$0xf] %vm737, %v674
        %740 = vst.msk [vmem:[%s262 + $0x8] sm:$0xf] %vm737, %v675
        %741 = vst.msk [vmem:[%s262 + $0xc] sm:$0xf] %vm737, %v676
        %742 = vst.msk [vmem:[%s262 + $0x10] sm:$0xf] %vm737, %v677
        %743 = vst.msk [vmem:[%s262 + $0x14] sm:$0xf] %vm737, %v678
        %744 = vst.msk [vmem:[%s262 + $0x18] sm:$0xf] %vm737, %v679
        %745 = vst.msk [vmem:[%s262 + $0x1c] sm:$0xf] %vm737, %v680
        %746 = vst.msk [vmem:[%s262 + $0x20] sm:$0xf] %vm737, %v681
        %747 = vst.msk [vmem:[%s262 + $0x24] sm:$0xf] %vm737, %v682
        %748 = vst.msk [vmem:[%s262 + $0x28] sm:$0xf] %vm737, %v683
        %749 = vst.msk [vmem:[%s262 + $0x2c] sm:$0xf] %vm737, %v684
        %750 = vst.msk [vmem:[%s262 + $0x30] sm:$0xf] %vm737, %v685
        %751 = vst.msk [vmem:[%s262 + $0x34] sm:$0xf] %vm737, %v686
        %752 = vst.msk [vmem:[%s262 + $0x38] sm:$0xf] %vm737, %v687
        %753 = vst.msk [vmem:[%s262 + $0x3c] sm:$0xf] %vm737, %v688
        %754 = vst.msk [vmem:[%s262 + $0x40] sm:$0xf] %vm737, %v689
        %755 = vst.msk [vmem:[%s262 + $0x44] sm:$0xf] %vm737, %v690
        %756 = vst.msk [vmem:[%s262 + $0x48] sm:$0xf] %vm737, %v691
        %757 = vst.msk [vmem:[%s262 + $0x4c] sm:$0xf] %vm737, %v692
        %758 = vst.msk [vmem:[%s262 + $0x50] sm:$0xf] %vm737, %v693
        %759 = vst.msk [vmem:[%s262 + $0x54] sm:$0xf] %vm737, %v694
        %760 = vst.msk [vmem:[%s262 + $0x58] sm:$0xf] %vm737, %v695
        %761 = vst.msk [vmem:[%s262 + $0x5c] sm:$0xf] %vm737, %v696
        %762 = vst.msk [vmem:[%s262 + $0x60] sm:$0xf] %vm737, %v697
        %763 = vst.msk [vmem:[%s262 + $0x64] sm:$0xf] %vm737, %v698
        %764 = vst.msk [vmem:[%s262 + $0x68] sm:$0xf] %vm737, %v699
        %765 = vst.msk [vmem:[%s262 + $0x6c] sm:$0xf] %vm737, %v700
        %766 = vst.msk [vmem:[%s262 + $0x70] sm:$0xf] %vm737, %v701
        %767 = vst.msk [vmem:[%s262 + $0x74] sm:$0xf] %vm737, %v702
        %768 = vst.msk [vmem:[%s262 + $0x78] sm:$0xf] %vm737, %v703
        %769 = vst.msk [vmem:[%s262 + $0x7c] sm:$0xf] %vm737, %v704
        %s770 = sand.u32 %s139, 1
        %s771 = scalar_lea.sflag [#allocation3], %s770
        %s772 = sand.u32 %s139, 1
        %s773 = smul.addr %s772, 2
        %s774 = scalar_lea.vmem [#allocation2], %s773
        %p775 = scmp.lt.s32.totalorder %s21, 1
        %s776 = scalar_select %p775, %s21, 1
        %s777 = smul.addr %s776, 32
        %s778 = smul.addr %s777, 4
        %s779 = scalar_lea.vmem %s6, %s778
        // Predicated region
        $region41: #{tpu_custom_call.1} parent=39 // pred_check
          %p780 = pneg %p149
        $region42: #{tpu_custom_call.1} parent=39 // pred_check_branch
          %782 = sbr.rel (%p780) target = $region44
        $region43: #{tpu_custom_call.1} parent=39 // pred_region
          %s784 = ssub.s32 32, 32
          %785 = vsyncadd %s771, %s784
          %s786 = smul.addr %s21, 2
          %s787 = smul.addr %s786, 16
          %s788 = scalar_lea.hbm %s5, %s787
          %s790 = sshll.u32 %s774, 4
          %s791 = int_to_ptr.vmem [resolvable:$true] %s790
          %793 = dma.vmem_to_hbm [thread:$0]  %s791, 32, %s788, %s771
        $region44: #{tpu_custom_call.1} parent=39 // pred_fallthru
          _
        // Predicated region
        $region45: #{tpu_custom_call.1} parent=39 // pred_check
          %p794 = pneg %p175
        $region46: #{tpu_custom_call.1} parent=39 // pred_check_branch
          %796 = sbr.rel (%p794) target = $region48
        $region47: #{tpu_custom_call.1} parent=39 // pred_region
          _
        $region48: #{tpu_custom_call.1} parent=39 // pred_fallthru
          _
      $region40: #{tpu_custom_call.1} parent=5 // pred_fallthru
        _
      %p797 = scmp.le.s32.totalorder 2, %s16
      // Predicated region
      $region49: #{tpu_custom_call.1} parent=5 // pred_check
        %p798 = pneg %p797
      $region50: #{tpu_custom_call.1} parent=5 // pred_check_branch
        %800 = sbr.rel (%p798) target = $region52
      $region51: #{tpu_custom_call.1} parent=5 // pred_region
        %s801 = ssub.s32 %s16, 2
        // Predicated region
        $region53: #{tpu_custom_call.1} parent=51 // pred_check
          %p802 = pneg %p155
        $region54: #{tpu_custom_call.1} parent=51 // pred_check_branch
          %804 = sbr.rel (%p802) target = $region56
        $region55: #{tpu_custom_call.1} parent=51 // pred_region
          %s805 = sand.u32 %s140, 1
          %s806 = scalar_lea.sflag [#allocation3], %s805
          %s807 = sand.u32 %s140, 1
          %s808 = smul.addr %s807, 2
          %s809 = scalar_lea.vmem [#allocation2], %s808
          %810 = dma.done %s806, 32
        $region56: #{tpu_custom_call.1} parent=51 // pred_fallthru
          _
        // Predicated region
        $region57: #{tpu_custom_call.1} parent=51 // pred_check
          %p811 = pneg %p181
        $region58: #{tpu_custom_call.1} parent=51 // pred_check_branch
          %813 = sbr.rel (%p811) target = $region60
        $region59: #{tpu_custom_call.1} parent=51 // pred_region
          %p814 = scmp.lt.s32.totalorder %s22, 1
          %s815 = scalar_select %p814, %s22, 1
          %s816 = smul.addr %s815, 32
          %s817 = smul.addr %s816, 4
          %s818 = scalar_lea.vmem %s6, %s817
        $region60: #{tpu_custom_call.1} parent=51 // pred_fallthru
          _
      $region52: #{tpu_custom_call.1} parent=5 // pred_fallthru
        _
    $region6: #{tpu_custom_call.1} parent=1 // loop_footer
      %s20 = sadd.s32 1, %s16
    $region7: #{tpu_custom_call.1} parent=1 // loop_footer_branch
      %15 = sbr.rel target = $region3
    $region8: #{tpu_custom_call.1} parent=1 // loop_exit
      _
    %819 = vsyncpa [#allocation3], 1
    %s820 = scalar_lea.sflag [#allocation3], 1
    %821 = vsyncpa %s820, 1

</llo_original>
